<compile_context>
chip_gen: v6e
topology: v6e:2x2x1
jax: 0.10.0
libtpu: 0.0.40
codegen_flags: <defaults>
</compile_context>

<pallas_src>
import jax
import jax.numpy as jnp
from jax.experimental import pallas as pl
from jax.experimental.pallas import tpu as pltpu

GAMMA = 0.5
LAMBDA_PRIMARY = 0.01   # args.lambda_primary (SLBR default)


def _pick_chunk(r_ms, bytes_per_mask_row, budget_bytes=8 << 20):
    """Largest divisor of r_ms (multiple of 8) whose per-step operand bytes fit budget."""
    if r_ms % 8 != 0:
        return r_ms                       # small inputs: one full block
    max_rows = max(8, budget_bytes // max(bytes_per_mask_row, 1))
    if r_ms <= max_rows:
        return r_ms
    d = (max_rows // 8) * 8
    while d >= 8:
        if r_ms % d == 0:
            return d
        d -= 8
    return r_ms


def _make_losses_kernel(n_im, n_ms, B, C, D, HW, gamma, lambda_primary, nsteps):
    f32 = jnp.float32
    n_acc = 1 + n_im + n_ms   # [area, masked-abs per image..., bce per mask...]

    def kernel(*refs):
        im_refs = refs[:n_im]                          # each (B, C, CHUNK, LAN)
        t_ref = refs[n_im]                             # (B, C, CHUNK, LAN)
        m_ref = refs[n_im + 1]                         # (B, CHUNK, LAN) single-channel mask
        ms_refs = refs[n_im + 2:n_im + 2 + n_ms]       # each (B, CHUNK, LAN)
        out_ref = refs[n_im + 2 + n_ms]                # (1, 128)
        acc_ref = refs[n_im + 3 + n_ms]                # (n_acc, B, 128) f32 scratch

        step = pl.program_id(0)

        @pl.when(step == 0)
        def _init():
            acc_ref[...] = jnp.zeros_like(acc_ref)

        # Upcast in-kernel (operands arrive in their native dtype).
        mc = m_ref[...].astype(f32)                    # (B, CHUNK, LAN), raw (unclamped) mask
        t = t_ref[...].astype(f32)                     # (B, C, CHUNK, LAN)

        # mask area partial: sublane-first reduce -> lane-dense (B, 128) accumulator.
        acc_ref[0, :, :] = acc_ref[0, :, :] + jnp.sum(mc, axis=1)

        # Per predicted image: recov - target == mask*(pred - target); mask >= 0 so
        # |(p-t)*m| = |p-t|*m -> sum |p-t| over channels first (cheap VPU adds), then
        # one multiply by the single-channel mask, then a sublane reduce.
        for k in range(n_im):
            p = im_refs[k][...].astype(f32)            # (B, C, CHUNK, LAN)
            d = jnp.sum(jnp.abs(p - t), axis=1)        # (B, CHUNK, LAN)
            acc_ref[1 + k, :, :] = acc_ref[1 + k, :, :] + jnp.sum(d * mc, axis=1)

        # BCE partials (torch.nn.BCELoss: mask clamped to [0,1], logs clamped at -100).
        m_t = jnp.clip(mc, 0.0, 1.0)
        one_m = 1.0 - m_t
        for k in range(n_ms):
            p = jnp.clip(ms_refs[k][...].astype(f32), 0.0, 1.0)
            log_p = jnp.maximum(jnp.log(p), -100.0)
            log_1mp = jnp.maximum(jnp.log(1.0 - p), -100.0)
            el = -(m_t * log_p + one_m * log_1mp)      # (B, CHUNK, LAN)
            acc_ref[1 + n_im + k, :, :] = acc_ref[1 + n_im + k, :, :] + jnp.sum(el, axis=1)

        @pl.when(step == nsteps - 1)
        def _finalize():
            inv_b = 1.0 / B
            inv_bd = 1.0 / (B * D)
            inv_bhw = 1.0 / (B * HW)

            # One cross-lane (XLU) reduce per quantity, done exactly once here.
            area = jnp.sum(acc_ref[0, :, :], axis=1, keepdims=True)       # (B, 1)
            inv_area = 1.0 / jnp.maximum(area, 1e-6)   # eps: guard all-zero-mask samples

            rel = []                                   # l1_relative per predicted image
            l1_total = jnp.zeros((1, 1), f32)          # sum_i mean-L1(recov_i, target)
            for k in range(n_im):
                s_b = jnp.sum(acc_ref[1 + k, :, :], axis=1, keepdims=True)        # (B, 1)
                rel.append(jnp.sum(s_b * inv_area, axis=0, keepdims=True) * inv_b)
                l1_total = l1_total + jnp.sum(s_b, axis=0, keepdims=True) * inv_bd

            bce = []
            for k in range(n_ms):
                s_b = jnp.sum(acc_ref[1 + n_im + k, :, :], axis=1, keepdims=True)
                bce.append(jnp.sum(s_b, axis=0, keepdims=True) * inv_bhw)

            pixel = rel[n_im - 1] + 1.5 * l1_total
            refine = rel[0] if n_im > 1 else jnp.zeros((1, 1), f32)

            if n_ms > 0:
                primary = bce[1::2][::-1]
                self_cal = bce[2::2][::-1]
                primary_loss = jnp.zeros((1, 1), f32)
                for i, v in enumerate(primary):
                    primary_loss = primary_loss + v * (gamma ** i)
                self_cal_loss = jnp.zeros((1, 1), f32)
                for i, v in enumerate(self_cal):
                    self_cal_loss = self_cal_loss + v * (gamma ** i)
                mask_l = bce[0] + self_cal_loss + lambda_primary * primary_loss
            else:
                mask_l = jnp.zeros((1, 1), f32)

            # Pack [pixel, refine, vgg(=0), mask] into one lane-dense (1, 128) row
            # -> a single unmasked 128-lane store.
            lane = jax.lax.broadcasted_iota(jnp.int32, (1, 128), 1)
            row = jnp.zeros((1, 128), f32)
            row = jnp.where(lane == 0, pixel, row)
            row = jnp.where(lane == 1, refine, row)
            # lane 2 stays 0.0 (vgg_loss disabled: lambda_content == 0)
            row = jnp.where(lane == 3, mask_l, row)
            out_ref[...] = row

    return kernel


def losses_forward(synthesis, pred_ims, target, pred_ms, mask,
                   *, lambda_primary=LAMBDA_PRIMARY, gamma=GAMMA):
    """JAX/Pallas equivalent of Losses.forward. `synthesis` is unused (as in PyTorch)."""
    del synthesis
    if not isinstance(pred_ims, (list, tuple)):
        pred_ims = [pred_ims]
    pred_ims = list(pred_ims)
    pred_ms = list(pred_ms)

    B, C, H, W = target.shape
    HW = H * W
    D = C * HW
    LAN = 128 if HW % 128 == 0 else HW      # lane-dense pixel packing when possible
    R_MS = HW // LAN
    n_im = len(pred_ims)
    n_ms = len(pred_ms)

    # Native-dtype pass-through (pure contiguous reshapes; no wrapper-side astype and
    # no HBM copies) -- the kernel upcasts to f32 right after each ref load.
    ims = [p.reshape(B, C, R_MS, LAN) for p in pred_ims]
    tgt = target.reshape(B, C, R_MS, LAN)
    mc = mask.reshape(B, R_MS, LAN)

    # F.interpolate(ms, size=mask.shape[2:], mode='bilinear') -- JAX glue outside the kernel.
    # TODO(synk): fold the bilinear upsample of the low-res pred_ms into the kernel
    #             (weighted adds / pltpu.roll) if the mask branch dominates the byte count.
    ms_list = []
    for ms in pred_ms:
        if ms.shape[2:] != (H, W):
            ms = jax.image.resize(ms, (ms.shape[0], ms.shape[1], H, W), method="bilinear")
        ms_list.append(ms.reshape(B, R_MS, LAN))

    operands = ims + [tgt, mc] + ms_list
    total_bytes = sum(int(op.size) * op.dtype.itemsize for op in operands)
    bytes_per_mask_row = max(1, total_bytes // max(R_MS, 1))
    chunk = _pick_chunk(R_MS, bytes_per_mask_row)
    nsteps = R_MS // chunk

    kernel = _make_losses_kernel(n_im, n_ms, B, C, D, HW, gamma, lambda_primary, nsteps)

    im_spec = pl.BlockSpec((B, C, chunk, LAN), lambda i: (0, 0, i, 0))
    ms_spec = pl.BlockSpec((B, chunk, LAN), lambda i: (0, i, 0))

    n_acc = 1 + n_im + n_ms
    scratch = [pltpu.VMEM((n_acc, B, 128), jnp.float32)]

    block_bytes = bytes_per_mask_row * chunk
    scratch_bytes = n_acc * max(B, 8) * 128 * 4
    vmem_limit = int(min(max(2 * block_bytes + scratch_bytes + (4 << 20), 16 << 20), 48 << 20))

    cost = pl.CostEstimate(
        flops=int(6 * n_im * B * D + 8 * n_ms * B * HW + 2 * B * HW),
        transcendentals=int(2 * n_ms * B * HW),
        bytes_accessed=int(total_bytes + 4 * 128),
    )

    out = pl.pallas_call(
        kernel,
        out_shape=jax.ShapeDtypeStruct((1, 128), jnp.float32),
        grid=(nsteps,),
        in_specs=[im_spec] * (n_im + 1) + [ms_spec] * (n_ms + 1),
        out_specs=pl.BlockSpec((1, 128), lambda i: (0, 0)),
        scratch_shapes=scratch,
        compiler_params=pltpu.CompilerParams(
            dimension_semantics=("arbitrary",),
            vmem_limit_bytes=vmem_limit,
        ),
        cost_estimate=cost,
    )(*ims, tgt, mc, *ms_list)

    pixel_loss = out[0, 0]
    refine_loss = out[0, 1]
    vgg_loss = out[0, 2]       # statically 0 (lambda_content == 0)
    mask_loss = out[0, 3]
    return pixel_loss, refine_loss, vgg_loss, mask_loss


if __name__ == "__main__":
    key = jax.random.PRNGKey(0)
    B, C, H, W = 2, 3, 16, 16
    ks = jax.random.split(key, 10)

    target = jax.random.uniform(ks[0], (B, C, H, W), jnp.float32)
    mask = jax.random.uniform(ks[1], (B, 1, H, W), jnp.float32)
    synthesis = jax.random.uniform(ks[2], (B, C, H, W), jnp.float32)   # unused by forward
    pred_ims = [
        jax.random.uniform(ks[3], (B, C, H, W), jnp.float32),          # coarse
        jax.random.uniform(ks[4], (B, C, H, W), jnp.float32),          # refined (pred_ims[-1])
    ]
    pred_ms = [
        jax.random.uniform(ks[5], (B, 1, H, W), jnp.float32),
        jax.random.uniform(ks[6], (B, 1, H // 2, W // 2), jnp.float32),  # gets upsampled
        jax.random.uniform(ks[7], (B, 1, H, W), jnp.float32),
        jax.random.uniform(ks[8], (B, 1, H // 4, W // 4), jnp.float32),  # gets upsampled
        jax.random.uniform(ks[9], (B, 1, H, W), jnp.float32),
    ]

    outs = losses_forward(synthesis, pred_ims, target, pred_ms, mask)
    jax.block_until_ready(outs)
    pixel_loss, refine_loss, vgg_loss, mask_loss = outs
    print("KERNEL_OK")
</pallas_src>

<mosaic_0001>
module attributes {stable_mosaic.version = 11 : i64} {
  func.func @kernel(%arg0: i32, %arg1: memref<2x3x2x128xf32, #tpu.memory_space<vmem>>, %arg2: memref<2x3x2x128xf32, #tpu.memory_space<vmem>>, %arg3: memref<2x3x2x128xf32, #tpu.memory_space<vmem>>, %arg4: memref<2x2x128xf32, #tpu.memory_space<vmem>>, %arg5: memref<2x2x128xf32, #tpu.memory_space<vmem>>, %arg6: memref<2x2x128xf32, #tpu.memory_space<vmem>>, %arg7: memref<2x2x128xf32, #tpu.memory_space<vmem>>, %arg8: memref<2x2x128xf32, #tpu.memory_space<vmem>>, %arg9: memref<2x2x128xf32, #tpu.memory_space<vmem>>, %arg10: memref<1x128xf32, #tpu.memory_space<vmem>>, %arg11: memref<8x2x128xf32, #tpu.memory_space<vmem>>) attributes {dimension_semantics = [#tpu.dimension_semantics<arbitrary>], iteration_bounds = array<i64: 1>, scalar_prefetch = 0 : i64, scratch_operands = 1 : i64, tpu.core_type = #tpu.core_type<tc>, window_params = [{transform_indices = @transform_0, window_bounds = array<i64: 2, 3, 2, 128>}, {transform_indices = @transform_1, window_bounds = array<i64: 2, 3, 2, 128>}, {transform_indices = @transform_2, window_bounds = array<i64: 2, 3, 2, 128>}, {transform_indices = @transform_3, window_bounds = array<i64: 2, 2, 128>}, {transform_indices = @transform_4, window_bounds = array<i64: 2, 2, 128>}, {transform_indices = @transform_5, window_bounds = array<i64: 2, 2, 128>}, {transform_indices = @transform_6, window_bounds = array<i64: 2, 2, 128>}, {transform_indices = @transform_7, window_bounds = array<i64: 2, 2, 128>}, {transform_indices = @transform_8, window_bounds = array<i64: 2, 2, 128>}, {pipeline_mode = #tpu.pipeline_mode<synchronous>, transform_indices = @transform_9, window_bounds = array<i64: 1, 128>}]} {
    %c0_i32 = arith.constant 0 : i32
    %0 = arith.cmpi eq, %arg0, %c0_i32 : i32
    %1 = arith.extui %0 : i1 to i32
    %c0_i32_0 = arith.constant 0 : i32
    %2 = arith.cmpi ne, %1, %c0_i32_0 : i32
    scf.if %2 {
      %cst_115 = arith.constant 0.000000e+00 : f32
      %170 = vector.broadcast %cst_115 : f32 to vector<8x2x128xf32>
      %c0_116 = arith.constant 0 : index
      %c0_117 = arith.constant 0 : index
      %c0_118 = arith.constant 0 : index
      %171 = vector.load %arg11[%c0_116, %c0_117, %c0_118] : memref<8x2x128xf32, #tpu.memory_space<vmem>>, vector<8x2x128xf32>
      tpu.vector_store %arg11[%c0_116, %c0_117, %c0_118], %170 {strides = array<i32>} : memref<8x2x128xf32, #tpu.memory_space<vmem>>, vector<8x2x128xf32>,
    } else {
    }
    %c0 = arith.constant 0 : index
    %c0_1 = arith.constant 0 : index
    %c0_2 = arith.constant 0 : index
    %3 = vector.load %arg4[%c0, %c0_1, %c0_2] : memref<2x2x128xf32, #tpu.memory_space<vmem>>, vector<2x2x128xf32>
    %c0_3 = arith.constant 0 : index
    %c0_4 = arith.constant 0 : index
    %c0_5 = arith.constant 0 : index
    %c0_6 = arith.constant 0 : index
    %4 = vector.load %arg3[%c0_3, %c0_4, %c0_5, %c0_6] : memref<2x3x2x128xf32, #tpu.memory_space<vmem>>, vector<2x3x2x128xf32>
    %c0_7 = arith.constant 0 : index
    %c0_8 = arith.constant 0 : index
    %c0_9 = arith.constant 0 : index
    %5 = vector.load %arg11[%c0_7, %c0_8, %c0_9] : memref<8x2x128xf32, #tpu.memory_space<vmem>>, vector<1x2x128xf32>
    %6 = vector.shape_cast %5 : vector<1x2x128xf32> to vector<2x128xf32>
    %cst = arith.constant dense<0.000000e+00> : vector<2x128xf32>
    %7 = vector.multi_reduction <add>, %3, %cst [1] : vector<2x2x128xf32> to vector<2x128xf32>
    %8 = arith.addf %6, %7 : vector<2x128xf32>
    %c0_10 = arith.constant 0 : index
    %c0_11 = arith.constant 0 : index
    %c0_12 = arith.constant 0 : index
    %9 = vector.load %arg11[%c0_10, %c0_11, %c0_12] : memref<8x2x128xf32, #tpu.memory_space<vmem>>, vector<1x2x128xf32>
    %10 = vector.shape_cast %9 : vector<1x2x128xf32> to vector<2x128xf32>
    %11 = vector.shape_cast %8 : vector<2x128xf32> to vector<1x2x128xf32>
    tpu.vector_store %arg11[%c0_10, %c0_11, %c0_12], %11 {strides = array<i32>} : memref<8x2x128xf32, #tpu.memory_space<vmem>>, vector<1x2x128xf32>,
    %c0_13 = arith.constant 0 : index
    %c0_14 = arith.constant 0 : index
    %c0_15 = arith.constant 0 : index
    %c0_16 = arith.constant 0 : index
    %12 = vector.load %arg1[%c0_13, %c0_14, %c0_15, %c0_16] : memref<2x3x2x128xf32, #tpu.memory_space<vmem>>, vector<2x3x2x128xf32>
    %13 = arith.subf %12, %4 : vector<2x3x2x128xf32>
    %14 = math.absf %13 : vector<2x3x2x128xf32>
    %cst_17 = arith.constant dense<0.000000e+00> : vector<2x2x128xf32>
    %15 = vector.multi_reduction <add>, %14, %cst_17 [1] : vector<2x3x2x128xf32> to vector<2x2x128xf32>
    %c1 = arith.constant 1 : index
    %c0_18 = arith.constant 0 : index
    %c0_19 = arith.constant 0 : index
    %16 = vector.load %arg11[%c1, %c0_18, %c0_19] : memref<8x2x128xf32, #tpu.memory_space<vmem>>, vector<1x2x128xf32>
    %17 = vector.shape_cast %16 : vector<1x2x128xf32> to vector<2x128xf32>
    %18 = arith.mulf %15, %3 : vector<2x2x128xf32>
    %cst_20 = arith.constant dense<0.000000e+00> : vector<2x128xf32>
    %19 = vector.multi_reduction <add>, %18, %cst_20 [1] : vector<2x2x128xf32> to vector<2x128xf32>
    %20 = arith.addf %17, %19 : vector<2x128xf32>
    %c1_21 = arith.constant 1 : index
    %c0_22 = arith.constant 0 : index
    %c0_23 = arith.constant 0 : index
    %21 = vector.load %arg11[%c1_21, %c0_22, %c0_23] : memref<8x2x128xf32, #tpu.memory_space<vmem>>, vector<1x2x128xf32>
    %22 = vector.shape_cast %21 : vector<1x2x128xf32> to vector<2x128xf32>
    %23 = vector.shape_cast %20 : vector<2x128xf32> to vector<1x2x128xf32>
    tpu.vector_store %arg11[%c1_21, %c0_22, %c0_23], %23 {strides = array<i32>} : memref<8x2x128xf32, #tpu.memory_space<vmem>>, vector<1x2x128xf32>,
    %c0_24 = arith.constant 0 : index
    %c0_25 = arith.constant 0 : index
    %c0_26 = arith.constant 0 : index
    %c0_27 = arith.constant 0 : index
    %24 = vector.load %arg2[%c0_24, %c0_25, %c0_26, %c0_27] : memref<2x3x2x128xf32, #tpu.memory_space<vmem>>, vector<2x3x2x128xf32>
    %25 = arith.subf %24, %4 : vector<2x3x2x128xf32>
    %26 = math.absf %25 : vector<2x3x2x128xf32>
    %cst_28 = arith.constant dense<0.000000e+00> : vector<2x2x128xf32>
    %27 = vector.multi_reduction <add>, %26, %cst_28 [1] : vector<2x3x2x128xf32> to vector<2x2x128xf32>
    %c2 = arith.constant 2 : index
    %c0_29 = arith.constant 0 : index
    %c0_30 = arith.constant 0 : index
    %28 = vector.load %arg11[%c2, %c0_29, %c0_30] : memref<8x2x128xf32, #tpu.memory_space<vmem>>, vector<1x2x128xf32>
    %29 = vector.shape_cast %28 : vector<1x2x128xf32> to vector<2x128xf32>
    %30 = arith.mulf %27, %3 : vector<2x2x128xf32>
    %cst_31 = arith.constant dense<0.000000e+00> : vector<2x128xf32>
    %31 = vector.multi_reduction <add>, %30, %cst_31 [1] : vector<2x2x128xf32> to vector<2x128xf32>
    %32 = arith.addf %29, %31 : vector<2x128xf32>
    %c2_32 = arith.constant 2 : index
    %c0_33 = arith.constant 0 : index
    %c0_34 = arith.constant 0 : index
    %33 = vector.load %arg11[%c2_32, %c0_33, %c0_34] : memref<8x2x128xf32, #tpu.memory_space<vmem>>, vector<1x2x128xf32>
    %34 = vector.shape_cast %33 : vector<1x2x128xf32> to vector<2x128xf32>
    %35 = vector.shape_cast %32 : vector<2x128xf32> to vector<1x2x128xf32>
    tpu.vector_store %arg11[%c2_32, %c0_33, %c0_34], %35 {strides = array<i32>} : memref<8x2x128xf32, #tpu.memory_space<vmem>>, vector<1x2x128xf32>,
    %cst_35 = arith.constant 0.000000e+00 : f32
    %cst_36 = arith.constant 1.000000e+00 : f32
    %36 = vector.broadcast %cst_35 : f32 to vector<2x2x128xf32>
    %37 = arith.maximumf %36, %3 : vector<2x2x128xf32>
    %38 = vector.broadcast %cst_36 : f32 to vector<2x2x128xf32>
    %39 = arith.minimumf %38, %37 : vector<2x2x128xf32>
    %cst_37 = arith.constant 1.000000e+00 : f32
    %40 = vector.broadcast %cst_37 : f32 to vector<2x2x128xf32>
    %41 = arith.subf %40, %39 : vector<2x2x128xf32>
    %c0_38 = arith.constant 0 : index
    %c0_39 = arith.constant 0 : index
    %c0_40 = arith.constant 0 : index
    %42 = vector.load %arg5[%c0_38, %c0_39, %c0_40] : memref<2x2x128xf32, #tpu.memory_space<vmem>>, vector<2x2x128xf32>
    %cst_41 = arith.constant 0.000000e+00 : f32
    %cst_42 = arith.constant 1.000000e+00 : f32
    %43 = vector.broadcast %cst_41 : f32 to vector<2x2x128xf32>
    %44 = arith.maximumf %43, %42 : vector<2x2x128xf32>
    %45 = vector.broadcast %cst_42 : f32 to vector<2x2x128xf32>
    %46 = arith.minimumf %45, %44 : vector<2x2x128xf32>
    %47 = math.log %46 : vector<2x2x128xf32>
    %cst_43 = arith.constant -1.000000e+02 : f32
    %48 = vector.broadcast %cst_43 : f32 to vector<2x2x128xf32>
    %49 = arith.maximumf %47, %48 : vector<2x2x128xf32>
    %cst_44 = arith.constant 1.000000e+00 : f32
    %50 = vector.broadcast %cst_44 : f32 to vector<2x2x128xf32>
    %51 = arith.subf %50, %46 : vector<2x2x128xf32>
    %52 = math.log %51 : vector<2x2x128xf32>
    %cst_45 = arith.constant -1.000000e+02 : f32
    %53 = vector.broadcast %cst_45 : f32 to vector<2x2x128xf32>
    %54 = arith.maximumf %52, %53 : vector<2x2x128xf32>
    %55 = arith.mulf %39, %49 : vector<2x2x128xf32>
    %56 = arith.mulf %41, %54 : vector<2x2x128xf32>
    %57 = arith.addf %55, %56 : vector<2x2x128xf32>
    %cst_46 = arith.constant 0.000000e+00 : f32
    %58 = vector.broadcast %cst_46 : f32 to vector<2x2x128xf32>
    %59 = arith.subf %58, %57 : vector<2x2x128xf32>
    %c3 = arith.constant 3 : index
    %c0_47 = arith.constant 0 : index
    %c0_48 = arith.constant 0 : index
    %60 = vector.load %arg11[%c3, %c0_47, %c0_48] : memref<8x2x128xf32, #tpu.memory_space<vmem>>, vector<1x2x128xf32>
    %61 = vector.shape_cast %60 : vector<1x2x128xf32> to vector<2x128xf32>
    %cst_49 = arith.constant dense<0.000000e+00> : vector<2x128xf32>
    %62 = vector.multi_reduction <add>, %59, %cst_49 [1] : vector<2x2x128xf32> to vector<2x128xf32>
    %63 = arith.addf %61, %62 : vector<2x128xf32>
    %c3_50 = arith.constant 3 : index
    %c0_51 = arith.constant 0 : index
    %c0_52 = arith.constant 0 : index
    %64 = vector.load %arg11[%c3_50, %c0_51, %c0_52] : memref<8x2x128xf32, #tpu.memory_space<vmem>>, vector<1x2x128xf32>
    %65 = vector.shape_cast %64 : vector<1x2x128xf32> to vector<2x128xf32>
    %66 = vector.shape_cast %63 : vector<2x128xf32> to vector<1x2x128xf32>
    tpu.vector_store %arg11[%c3_50, %c0_51, %c0_52], %66 {strides = array<i32>} : memref<8x2x128xf32, #tpu.memory_space<vmem>>, vector<1x2x128xf32>,
    %c0_53 = arith.constant 0 : index
    %c0_54 = arith.constant 0 : index
    %c0_55 = arith.constant 0 : index
    %67 = vector.load %arg6[%c0_53, %c0_54, %c0_55] : memref<2x2x128xf32, #tpu.memory_space<vmem>>, vector<2x2x128xf32>
    %cst_56 = arith.constant 0.000000e+00 : f32
    %cst_57 = arith.constant 1.000000e+00 : f32
    %68 = vector.broadcast %cst_56 : f32 to vector<2x2x128xf32>
    %69 = arith.maximumf %68, %67 : vector<2x2x128xf32>
    %70 = vector.broadcast %cst_57 : f32 to vector<2x2x128xf32>
    %71 = arith.minimumf %70, %69 : vector<2x2x128xf32>
    %72 = math.log %71 : vector<2x2x128xf32>
    %cst_58 = arith.constant -1.000000e+02 : f32
    %73 = vector.broadcast %cst_58 : f32 to vector<2x2x128xf32>
    %74 = arith.maximumf %72, %73 : vector<2x2x128xf32>
    %cst_59 = arith.constant 1.000000e+00 : f32
    %75 = vector.broadcast %cst_59 : f32 to vector<2x2x128xf32>
    %76 = arith.subf %75, %71 : vector<2x2x128xf32>
    %77 = math.log %76 : vector<2x2x128xf32>
    %cst_60 = arith.constant -1.000000e+02 : f32
    %78 = vector.broadcast %cst_60 : f32 to vector<2x2x128xf32>
    %79 = arith.maximumf %77, %78 : vector<2x2x128xf32>
    %80 = arith.mulf %39, %74 : vector<2x2x128xf32>
    %81 = arith.mulf %41, %79 : vector<2x2x128xf32>
    %82 = arith.addf %80, %81 : vector<2x2x128xf32>
    %cst_61 = arith.constant 0.000000e+00 : f32
    %83 = vector.broadcast %cst_61 : f32 to vector<2x2x128xf32>
    %84 = arith.subf %83, %82 : vector<2x2x128xf32>
    %c4 = arith.constant 4 : index
    %c0_62 = arith.constant 0 : index
    %c0_63 = arith.constant 0 : index
    %85 = vector.load %arg11[%c4, %c0_62, %c0_63] : memref<8x2x128xf32, #tpu.memory_space<vmem>>, vector<1x2x128xf32>
    %86 = vector.shape_cast %85 : vector<1x2x128xf32> to vector<2x128xf32>
    %cst_64 = arith.constant dense<0.000000e+00> : vector<2x128xf32>
    %87 = vector.multi_reduction <add>, %84, %cst_64 [1] : vector<2x2x128xf32> to vector<2x128xf32>
    %88 = arith.addf %86, %87 : vector<2x128xf32>
    %c4_65 = arith.constant 4 : index
    %c0_66 = arith.constant 0 : index
    %c0_67 = arith.constant 0 : index
    %89 = vector.load %arg11[%c4_65, %c0_66, %c0_67] : memref<8x2x128xf32, #tpu.memory_space<vmem>>, vector<1x2x128xf32>
    %90 = vector.shape_cast %89 : vector<1x2x128xf32> to vector<2x128xf32>
    %91 = vector.shape_cast %88 : vector<2x128xf32> to vector<1x2x128xf32>
    tpu.vector_store %arg11[%c4_65, %c0_66, %c0_67], %91 {strides = array<i32>} : memref<8x2x128xf32, #tpu.memory_space<vmem>>, vector<1x2x128xf32>,
    %c0_68 = arith.constant 0 : index
    %c0_69 = arith.constant 0 : index
    %c0_70 = arith.constant 0 : index
    %92 = vector.load %arg7[%c0_68, %c0_69, %c0_70] : memref<2x2x128xf32, #tpu.memory_space<vmem>>, vector<2x2x128xf32>
    %cst_71 = arith.constant 0.000000e+00 : f32
    %cst_72 = arith.constant 1.000000e+00 : f32
    %93 = vector.broadcast %cst_71 : f32 to vector<2x2x128xf32>
    %94 = arith.maximumf %93, %92 : vector<2x2x128xf32>
    %95 = vector.broadcast %cst_72 : f32 to vector<2x2x128xf32>
    %96 = arith.minimumf %95, %94 : vector<2x2x128xf32>
    %97 = math.log %96 : vector<2x2x128xf32>
    %cst_73 = arith.constant -1.000000e+02 : f32
    %98 = vector.broadcast %cst_73 : f32 to vector<2x2x128xf32>
    %99 = arith.maximumf %97, %98 : vector<2x2x128xf32>
    %cst_74 = arith.constant 1.000000e+00 : f32
    %100 = vector.broadcast %cst_74 : f32 to vector<2x2x128xf32>
    %101 = arith.subf %100, %96 : vector<2x2x128xf32>
    %102 = math.log %101 : vector<2x2x128xf32>
    %cst_75 = arith.constant -1.000000e+02 : f32
    %103 = vector.broadcast %cst_75 : f32 to vector<2x2x128xf32>
    %104 = arith.maximumf %102, %103 : vector<2x2x128xf32>
    %105 = arith.mulf %39, %99 : vector<2x2x128xf32>
    %106 = arith.mulf %41, %104 : vector<2x2x128xf32>
    %107 = arith.addf %105, %106 : vector<2x2x128xf32>
    %cst_76 = arith.constant 0.000000e+00 : f32
    %108 = vector.broadcast %cst_76 : f32 to vector<2x2x128xf32>
    %109 = arith.subf %108, %107 : vector<2x2x128xf32>
    %c5 = arith.constant 5 : index
    %c0_77 = arith.constant 0 : index
    %c0_78 = arith.constant 0 : index
    %110 = vector.load %arg11[%c5, %c0_77, %c0_78] : memref<8x2x128xf32, #tpu.memory_space<vmem>>, vector<1x2x128xf32>
    %111 = vector.shape_cast %110 : vector<1x2x128xf32> to vector<2x128xf32>
    %cst_79 = arith.constant dense<0.000000e+00> : vector<2x128xf32>
    %112 = vector.multi_reduction <add>, %109, %cst_79 [1] : vector<2x2x128xf32> to vector<2x128xf32>
    %113 = arith.addf %111, %112 : vector<2x128xf32>
    %c5_80 = arith.constant 5 : index
    %c0_81 = arith.constant 0 : index
    %c0_82 = arith.constant 0 : index
    %114 = vector.load %arg11[%c5_80, %c0_81, %c0_82] : memref<8x2x128xf32, #tpu.memory_space<vmem>>, vector<1x2x128xf32>
    %115 = vector.shape_cast %114 : vector<1x2x128xf32> to vector<2x128xf32>
    %116 = vector.shape_cast %113 : vector<2x128xf32> to vector<1x2x128xf32>
    tpu.vector_store %arg11[%c5_80, %c0_81, %c0_82], %116 {strides = array<i32>} : memref<8x2x128xf32, #tpu.memory_space<vmem>>, vector<1x2x128xf32>,
    %c0_83 = arith.constant 0 : index
    %c0_84 = arith.constant 0 : index
    %c0_85 = arith.constant 0 : index
    %117 = vector.load %arg8[%c0_83, %c0_84, %c0_85] : memref<2x2x128xf32, #tpu.memory_space<vmem>>, vector<2x2x128xf32>
    %cst_86 = arith.constant 0.000000e+00 : f32
    %cst_87 = arith.constant 1.000000e+00 : f32
    %118 = vector.broadcast %cst_86 : f32 to vector<2x2x128xf32>
    %119 = arith.maximumf %118, %117 : vector<2x2x128xf32>
    %120 = vector.broadcast %cst_87 : f32 to vector<2x2x128xf32>
    %121 = arith.minimumf %120, %119 : vector<2x2x128xf32>
    %122 = math.log %121 : vector<2x2x128xf32>
    %cst_88 = arith.constant -1.000000e+02 : f32
    %123 = vector.broadcast %cst_88 : f32 to vector<2x2x128xf32>
    %124 = arith.maximumf %122, %123 : vector<2x2x128xf32>
    %cst_89 = arith.constant 1.000000e+00 : f32
    %125 = vector.broadcast %cst_89 : f32 to vector<2x2x128xf32>
    %126 = arith.subf %125, %121 : vector<2x2x128xf32>
    %127 = math.log %126 : vector<2x2x128xf32>
    %cst_90 = arith.constant -1.000000e+02 : f32
    %128 = vector.broadcast %cst_90 : f32 to vector<2x2x128xf32>
    %129 = arith.maximumf %127, %128 : vector<2x2x128xf32>
    %130 = arith.mulf %39, %124 : vector<2x2x128xf32>
    %131 = arith.mulf %41, %129 : vector<2x2x128xf32>
    %132 = arith.addf %130, %131 : vector<2x2x128xf32>
    %cst_91 = arith.constant 0.000000e+00 : f32
    %133 = vector.broadcast %cst_91 : f32 to vector<2x2x128xf32>
    %134 = arith.subf %133, %132 : vector<2x2x128xf32>
    %c6 = arith.constant 6 : index
    %c0_92 = arith.constant 0 : index
    %c0_93 = arith.constant 0 : index
    %135 = vector.load %arg11[%c6, %c0_92, %c0_93] : memref<8x2x128xf32, #tpu.memory_space<vmem>>, vector<1x2x128xf32>
    %136 = vector.shape_cast %135 : vector<1x2x128xf32> to vector<2x128xf32>
    %cst_94 = arith.constant dense<0.000000e+00> : vector<2x128xf32>
    %137 = vector.multi_reduction <add>, %134, %cst_94 [1] : vector<2x2x128xf32> to vector<2x128xf32>
    %138 = arith.addf %136, %137 : vector<2x128xf32>
    %c6_95 = arith.constant 6 : index
    %c0_96 = arith.constant 0 : index
    %c0_97 = arith.constant 0 : index
    %139 = vector.load %arg11[%c6_95, %c0_96, %c0_97] : memref<8x2x128xf32, #tpu.memory_space<vmem>>, vector<1x2x128xf32>
    %140 = vector.shape_cast %139 : vector<1x2x128xf32> to vector<2x128xf32>
    %141 = vector.shape_cast %138 : vector<2x128xf32> to vector<1x2x128xf32>
    tpu.vector_store %arg11[%c6_95, %c0_96, %c0_97], %141 {strides = array<i32>} : memref<8x2x128xf32, #tpu.memory_space<vmem>>, vector<1x2x128xf32>,
    %c0_98 = arith.constant 0 : index
    %c0_99 = arith.constant 0 : index
    %c0_100 = arith.constant 0 : index
    %142 = vector.load %arg9[%c0_98, %c0_99, %c0_100] : memref<2x2x128xf32, #tpu.memory_space<vmem>>, vector<2x2x128xf32>
    %cst_101 = arith.constant 0.000000e+00 : f32
    %cst_102 = arith.constant 1.000000e+00 : f32
    %143 = vector.broadcast %cst_101 : f32 to vector<2x2x128xf32>
    %144 = arith.maximumf %143, %142 : vector<2x2x128xf32>
    %145 = vector.broadcast %cst_102 : f32 to vector<2x2x128xf32>
    %146 = arith.minimumf %145, %144 : vector<2x2x128xf32>
    %147 = math.log %146 : vector<2x2x128xf32>
    %cst_103 = arith.constant -1.000000e+02 : f32
    %148 = vector.broadcast %cst_103 : f32 to vector<2x2x128xf32>
    %149 = arith.maximumf %147, %148 : vector<2x2x128xf32>
    %cst_104 = arith.constant 1.000000e+00 : f32
    %150 = vector.broadcast %cst_104 : f32 to vector<2x2x128xf32>
    %151 = arith.subf %150, %146 : vector<2x2x128xf32>
    %152 = math.log %151 : vector<2x2x128xf32>
    %cst_105 = arith.constant -1.000000e+02 : f32
    %153 = vector.broadcast %cst_105 : f32 to vector<2x2x128xf32>
    %154 = arith.maximumf %152, %153 : vector<2x2x128xf32>
    %155 = arith.mulf %39, %149 : vector<2x2x128xf32>
    %156 = arith.mulf %41, %154 : vector<2x2x128xf32>
    %157 = arith.addf %155, %156 : vector<2x2x128xf32>
    %cst_106 = arith.constant 0.000000e+00 : f32
    %158 = vector.broadcast %cst_106 : f32 to vector<2x2x128xf32>
    %159 = arith.subf %158, %157 : vector<2x2x128xf32>
    %c7 = arith.constant 7 : index
    %c0_107 = arith.constant 0 : index
    %c0_108 = arith.constant 0 : index
    %160 = vector.load %arg11[%c7, %c0_107, %c0_108] : memref<8x2x128xf32, #tpu.memory_space<vmem>>, vector<1x2x128xf32>
    %161 = vector.shape_cast %160 : vector<1x2x128xf32> to vector<2x128xf32>
    %cst_109 = arith.constant dense<0.000000e+00> : vector<2x128xf32>
    %162 = vector.multi_reduction <add>, %159, %cst_109 [1] : vector<2x2x128xf32> to vector<2x128xf32>
    %163 = arith.addf %161, %162 : vector<2x128xf32>
    %c7_110 = arith.constant 7 : index
    %c0_111 = arith.constant 0 : index
    %c0_112 = arith.constant 0 : index
    %164 = vector.load %arg11[%c7_110, %c0_111, %c0_112] : memref<8x2x128xf32, #tpu.memory_space<vmem>>, vector<1x2x128xf32>
    %165 = vector.shape_cast %164 : vector<1x2x128xf32> to vector<2x128xf32>
    %166 = vector.shape_cast %163 : vector<2x128xf32> to vector<1x2x128xf32>
    tpu.vector_store %arg11[%c7_110, %c0_111, %c0_112], %166 {strides = array<i32>} : memref<8x2x128xf32, #tpu.memory_space<vmem>>, vector<1x2x128xf32>,
    %c0_i32_113 = arith.constant 0 : i32
    %167 = arith.cmpi eq, %arg0, %c0_i32_113 : i32
    %168 = arith.extui %167 : i1 to i32
    %c0_i32_114 = arith.constant 0 : i32
    %169 = arith.cmpi ne, %168, %c0_i32_114 : i32
    scf.if %169 {
      %c0_115 = arith.constant 0 : index
      %c0_116 = arith.constant 0 : index
      %c0_117 = arith.constant 0 : index
      %170 = vector.load %arg11[%c0_115, %c0_116, %c0_117] : memref<8x2x128xf32, #tpu.memory_space<vmem>>, vector<1x2x128xf32>
      %171 = vector.shape_cast %170 : vector<1x2x128xf32> to vector<2x128xf32>
      %cst_118 = arith.constant dense<0.000000e+00> : vector<2xf32>
      %172 = vector.multi_reduction <add>, %171, %cst_118 [1] : vector<2x128xf32> to vector<2xf32>
      %173 = vector.shape_cast %172 : vector<2xf32> to vector<2x1xf32>
      %cst_119 = arith.constant 9.99999997E-7 : f32
      %174 = vector.broadcast %cst_119 : f32 to vector<2x1xf32>
      %175 = arith.maximumf %173, %174 : vector<2x1xf32>
      %cst_120 = arith.constant 1.000000e+00 : f32
      %176 = vector.broadcast %cst_120 : f32 to vector<2x1xf32>
      %177 = arith.divf %176, %175 : vector<2x1xf32>
      %cst_121 = arith.constant 0.000000e+00 : f32
      %178 = vector.broadcast %cst_121 : f32 to vector<1x1xf32>
      %c1_122 = arith.constant 1 : index
      %c0_123 = arith.constant 0 : index
      %c0_124 = arith.constant 0 : index
      %179 = vector.load %arg11[%c1_122, %c0_123, %c0_124] : memref<8x2x128xf32, #tpu.memory_space<vmem>>, vector<1x2x128xf32>
      %180 = vector.shape_cast %179 : vector<1x2x128xf32> to vector<2x128xf32>
      %cst_125 = arith.constant dense<0.000000e+00> : vector<2xf32>
      %181 = vector.multi_reduction <add>, %180, %cst_125 [1] : vector<2x128xf32> to vector<2xf32>
      %182 = vector.shape_cast %181 : vector<2xf32> to vector<2x1xf32>
      %183 = arith.mulf %182, %177 : vector<2x1xf32>
      %cst_126 = arith.constant dense<0.000000e+00> : vector<1xf32>
      %184 = vector.multi_reduction <add>, %183, %cst_126 [0] : vector<2x1xf32> to vector<1xf32>
      %185 = vector.shape_cast %184 : vector<1xf32> to vector<1x1xf32>
      %cst_127 = arith.constant 5.000000e-01 : f32
      %186 = vector.broadcast %cst_127 : f32 to vector<1x1xf32>
      %187 = arith.mulf %185, %186 : vector<1x1xf32>
      %cst_128 = arith.constant dense<0.000000e+00> : vector<1xf32>
      %188 = vector.multi_reduction <add>, %182, %cst_128 [0] : vector<2x1xf32> to vector<1xf32>
      %189 = vector.shape_cast %188 : vector<1xf32> to vector<1x1xf32>
      %cst_129 = arith.constant 6.51041686E-4 : f32
      %190 = vector.broadcast %cst_129 : f32 to vector<1x1xf32>
      %191 = arith.mulf %189, %190 : vector<1x1xf32>
      %192 = arith.addf %178, %191 : vector<1x1xf32>
      %c2_130 = arith.constant 2 : index
      %c0_131 = arith.constant 0 : index
      %c0_132 = arith.constant 0 : index
      %193 = vector.load %arg11[%c2_130, %c0_131, %c0_132] : memref<8x2x128xf32, #tpu.memory_space<vmem>>, vector<1x2x128xf32>
      %194 = vector.shape_cast %193 : vector<1x2x128xf32> to vector<2x128xf32>
      %cst_133 = arith.constant dense<0.000000e+00> : vector<2xf32>
      %195 = vector.multi_reduction <add>, %194, %cst_133 [1] : vector<2x128xf32> to vector<2xf32>
      %196 = vector.shape_cast %195 : vector<2xf32> to vector<2x1xf32>
      %197 = arith.mulf %196, %177 : vector<2x1xf32>
      %cst_134 = arith.constant dense<0.000000e+00> : vector<1xf32>
      %198 = vector.multi_reduction <add>, %197, %cst_134 [0] : vector<2x1xf32> to vector<1xf32>
      %199 = vector.shape_cast %198 : vector<1xf32> to vector<1x1xf32>
      %cst_135 = arith.constant 5.000000e-01 : f32
      %200 = vector.broadcast %cst_135 : f32 to vector<1x1xf32>
      %201 = arith.mulf %199, %200 : vector<1x1xf32>
      %cst_136 = arith.constant dense<0.000000e+00> : vector<1xf32>
      %202 = vector.multi_reduction <add>, %196, %cst_136 [0] : vector<2x1xf32> to vector<1xf32>
      %203 = vector.shape_cast %202 : vector<1xf32> to vector<1x1xf32>
      %cst_137 = arith.constant 6.51041686E-4 : f32
      %204 = vector.broadcast %cst_137 : f32 to vector<1x1xf32>
      %205 = arith.mulf %203, %204 : vector<1x1xf32>
      %206 = arith.addf %192, %205 : vector<1x1xf32>
      %c3_138 = arith.constant 3 : index
      %c0_139 = arith.constant 0 : index
      %c0_140 = arith.constant 0 : index
      %207 = vector.load %arg11[%c3_138, %c0_139, %c0_140] : memref<8x2x128xf32, #tpu.memory_space<vmem>>, vector<1x2x128xf32>
      %208 = vector.shape_cast %207 : vector<1x2x128xf32> to vector<2x128xf32>
      %cst_141 = arith.constant dense<0.000000e+00> : vector<2xf32>
      %209 = vector.multi_reduction <add>, %208, %cst_141 [1] : vector<2x128xf32> to vector<2xf32>
      %210 = vector.shape_cast %209 : vector<2xf32> to vector<2x1xf32>
      %cst_142 = arith.constant dense<0.000000e+00> : vector<1xf32>
      %211 = vector.multi_reduction <add>, %210, %cst_142 [0] : vector<2x1xf32> to vector<1xf32>
      %212 = vector.shape_cast %211 : vector<1xf32> to vector<1x1xf32>
      %cst_143 = arith.constant 0.001953125 : f32
      %213 = vector.broadcast %cst_143 : f32 to vector<1x1xf32>
      %214 = arith.mulf %212, %213 : vector<1x1xf32>
      %c4_144 = arith.constant 4 : index
      %c0_145 = arith.constant 0 : index
      %c0_146 = arith.constant 0 : index
      %215 = vector.load %arg11[%c4_144, %c0_145, %c0_146] : memref<8x2x128xf32, #tpu.memory_space<vmem>>, vector<1x2x128xf32>
      %216 = vector.shape_cast %215 : vector<1x2x128xf32> to vector<2x128xf32>
      %cst_147 = arith.constant dense<0.000000e+00> : vector<2xf32>
      %217 = vector.multi_reduction <add>, %216, %cst_147 [1] : vector<2x128xf32> to vector<2xf32>
      %218 = vector.shape_cast %217 : vector<2xf32> to vector<2x1xf32>
      %cst_148 = arith.constant dense<0.000000e+00> : vector<1xf32>
      %219 = vector.multi_reduction <add>, %218, %cst_148 [0] : vector<2x1xf32> to vector<1xf32>
      %220 = vector.shape_cast %219 : vector<1xf32> to vector<1x1xf32>
      %cst_149 = arith.constant 0.001953125 : f32
      %221 = vector.broadcast %cst_149 : f32 to vector<1x1xf32>
      %222 = arith.mulf %220, %221 : vector<1x1xf32>
      %c5_150 = arith.constant 5 : index
      %c0_151 = arith.constant 0 : index
      %c0_152 = arith.constant 0 : index
      %223 = vector.load %arg11[%c5_150, %c0_151, %c0_152] : memref<8x2x128xf32, #tpu.memory_space<vmem>>, vector<1x2x128xf32>
      %224 = vector.shape_cast %223 : vector<1x2x128xf32> to vector<2x128xf32>
      %cst_153 = arith.constant dense<0.000000e+00> : vector<2xf32>
      %225 = vector.multi_reduction <add>, %224, %cst_153 [1] : vector<2x128xf32> to vector<2xf32>
      %226 = vector.shape_cast %225 : vector<2xf32> to vector<2x1xf32>
      %cst_154 = arith.constant dense<0.000000e+00> : vector<1xf32>
      %227 = vector.multi_reduction <add>, %226, %cst_154 [0] : vector<2x1xf32> to vector<1xf32>
      %228 = vector.shape_cast %227 : vector<1xf32> to vector<1x1xf32>
      %cst_155 = arith.constant 0.001953125 : f32
      %229 = vector.broadcast %cst_155 : f32 to vector<1x1xf32>
      %230 = arith.mulf %228, %229 : vector<1x1xf32>
      %c6_156 = arith.constant 6 : index
      %c0_157 = arith.constant 0 : index
      %c0_158 = arith.constant 0 : index
      %231 = vector.load %arg11[%c6_156, %c0_157, %c0_158] : memref<8x2x128xf32, #tpu.memory_space<vmem>>, vector<1x2x128xf32>
      %232 = vector.shape_cast %231 : vector<1x2x128xf32> to vector<2x128xf32>
      %cst_159 = arith.constant dense<0.000000e+00> : vector<2xf32>
      %233 = vector.multi_reduction <add>, %232, %cst_159 [1] : vector<2x128xf32> to vector<2xf32>
      %234 = vector.shape_cast %233 : vector<2xf32> to vector<2x1xf32>
      %cst_160 = arith.constant dense<0.000000e+00> : vector<1xf32>
      %235 = vector.multi_reduction <add>, %234, %cst_160 [0] : vector<2x1xf32> to vector<1xf32>
      %236 = vector.shape_cast %235 : vector<1xf32> to vector<1x1xf32>
      %cst_161 = arith.constant 0.001953125 : f32
      %237 = vector.broadcast %cst_161 : f32 to vector<1x1xf32>
      %238 = arith.mulf %236, %237 : vector<1x1xf32>
      %c7_162 = arith.constant 7 : index
      %c0_163 = arith.constant 0 : index
      %c0_164 = arith.constant 0 : index
      %239 = vector.load %arg11[%c7_162, %c0_163, %c0_164] : memref<8x2x128xf32, #tpu.memory_space<vmem>>, vector<1x2x128xf32>
      %240 = vector.shape_cast %239 : vector<1x2x128xf32> to vector<2x128xf32>
      %cst_165 = arith.constant dense<0.000000e+00> : vector<2xf32>
      %241 = vector.multi_reduction <add>, %240, %cst_165 [1] : vector<2x128xf32> to vector<2xf32>
      %242 = vector.shape_cast %241 : vector<2xf32> to vector<2x1xf32>
      %cst_166 = arith.constant dense<0.000000e+00> : vector<1xf32>
      %243 = vector.multi_reduction <add>, %242, %cst_166 [0] : vector<2x1xf32> to vector<1xf32>
      %244 = vector.shape_cast %243 : vector<1xf32> to vector<1x1xf32>
      %cst_167 = arith.constant 0.001953125 : f32
      %245 = vector.broadcast %cst_167 : f32 to vector<1x1xf32>
      %246 = arith.mulf %244, %245 : vector<1x1xf32>
      %cst_168 = arith.constant 1.500000e+00 : f32
      %247 = vector.broadcast %cst_168 : f32 to vector<1x1xf32>
      %248 = arith.mulf %247, %206 : vector<1x1xf32>
      %249 = arith.addf %201, %248 : vector<1x1xf32>
      %cst_169 = arith.constant 0.000000e+00 : f32
      %250 = vector.broadcast %cst_169 : f32 to vector<1x1xf32>
      %cst_170 = arith.constant 1.000000e+00 : f32
      %251 = vector.broadcast %cst_170 : f32 to vector<1x1xf32>
      %252 = arith.mulf %238, %251 : vector<1x1xf32>
      %253 = arith.addf %250, %252 : vector<1x1xf32>
      %cst_171 = arith.constant 5.000000e-01 : f32
      %254 = vector.broadcast %cst_171 : f32 to vector<1x1xf32>
      %255 = arith.mulf %222, %254 : vector<1x1xf32>
      %256 = arith.addf %253, %255 : vector<1x1xf32>
      %cst_172 = arith.constant 0.000000e+00 : f32
      %257 = vector.broadcast %cst_172 : f32 to vector<1x1xf32>
      %cst_173 = arith.constant 1.000000e+00 : f32
      %258 = vector.broadcast %cst_173 : f32 to vector<1x1xf32>
      %259 = arith.mulf %246, %258 : vector<1x1xf32>
      %260 = arith.addf %257, %259 : vector<1x1xf32>
      %cst_174 = arith.constant 5.000000e-01 : f32
      %261 = vector.broadcast %cst_174 : f32 to vector<1x1xf32>
      %262 = arith.mulf %230, %261 : vector<1x1xf32>
      %263 = arith.addf %260, %262 : vector<1x1xf32>
      %264 = arith.addf %214, %263 : vector<1x1xf32>
      %cst_175 = arith.constant 0.00999999977 : f32
      %265 = vector.broadcast %cst_175 : f32 to vector<1x1xf32>
      %266 = arith.mulf %265, %256 : vector<1x1xf32>
      %267 = arith.addf %264, %266 : vector<1x1xf32>
      %268 = tpu.iota {dimensions = array<i32: 1>} : vector<1x128xi32>
      %cst_176 = arith.constant 0.000000e+00 : f32
      %269 = vector.broadcast %cst_176 : f32 to vector<1x128xf32>
      %c0_i32_177 = arith.constant 0 : i32
      %270 = vector.broadcast %c0_i32_177 : i32 to vector<1x128xi32>
      %271 = arith.cmpi eq, %268, %270 : vector<1x128xi32>
      %272 = vector.shape_cast %249 : vector<1x1xf32> to vector<1x1xf32>
      %273 = vector.broadcast %272 : vector<1x1xf32> to vector<1x128xf32>
      %274 = arith.select %271, %273, %269 : vector<1x128xi1>, vector<1x128xf32>
      %c1_i32 = arith.constant 1 : i32
      %275 = vector.broadcast %c1_i32 : i32 to vector<1x128xi32>
      %276 = arith.cmpi eq, %268, %275 : vector<1x128xi32>
      %277 = vector.shape_cast %187 : vector<1x1xf32> to vector<1x1xf32>
      %278 = vector.broadcast %277 : vector<1x1xf32> to vector<1x128xf32>
      %279 = arith.select %276, %278, %274 : vector<1x128xi1>, vector<1x128xf32>
      %c3_i32 = arith.constant 3 : i32
      %280 = vector.broadcast %c3_i32 : i32 to vector<1x128xi32>
      %281 = arith.cmpi eq, %268, %280 : vector<1x128xi32>
      %282 = vector.shape_cast %267 : vector<1x1xf32> to vector<1x1xf32>
      %283 = vector.broadcast %282 : vector<1x1xf32> to vector<1x128xf32>
      %284 = arith.select %281, %283, %279 : vector<1x128xi1>, vector<1x128xf32>
      %c0_178 = arith.constant 0 : index
      %c0_179 = arith.constant 0 : index
      %285 = vector.load %arg10[%c0_178, %c0_179] : memref<1x128xf32, #tpu.memory_space<vmem>>, vector<1x128xf32>
      tpu.vector_store %arg10[%c0_178, %c0_179], %284 {strides = array<i32>} : memref<1x128xf32, #tpu.memory_space<vmem>>, vector<1x128xf32>,
    } else {
    }
    return
  }
  func.func @transform_0(%arg0: i32) -> (i32, i32, i32, i32) {
    %c0_i32 = arith.constant 0 : i32
    %c0_i32_0 = arith.constant 0 : i32
    %c0_i32_1 = arith.constant 0 : i32
    %c0_i32_2 = arith.constant 0 : i32
    return %c0_i32, %c0_i32_0, %arg0, %c0_i32_1 : i32, i32, i32, i32
  }
  func.func @transform_1(%arg0: i32) -> (i32, i32, i32, i32) {
    %c0_i32 = arith.constant 0 : i32
    %c0_i32_0 = arith.constant 0 : i32
    %c0_i32_1 = arith.constant 0 : i32
    %c0_i32_2 = arith.constant 0 : i32
    return %c0_i32, %c0_i32_0, %arg0, %c0_i32_1 : i32, i32, i32, i32
  }
  func.func @transform_2(%arg0: i32) -> (i32, i32, i32, i32) {
    %c0_i32 = arith.constant 0 : i32
    %c0_i32_0 = arith.constant 0 : i32
    %c0_i32_1 = arith.constant 0 : i32
    %c0_i32_2 = arith.constant 0 : i32
    return %c0_i32, %c0_i32_0, %arg0, %c0_i32_1 : i32, i32, i32, i32
  }
  func.func @transform_3(%arg0: i32) -> (i32, i32, i32) {
    %c0_i32 = arith.constant 0 : i32
    %c0_i32_0 = arith.constant 0 : i32
    %c0_i32_1 = arith.constant 0 : i32
    return %c0_i32, %arg0, %c0_i32_0 : i32, i32, i32
  }
  func.func @transform_4(%arg0: i32) -> (i32, i32, i32) {
    %c0_i32 = arith.constant 0 : i32
    %c0_i32_0 = arith.constant 0 : i32
    %c0_i32_1 = arith.constant 0 : i32
    return %c0_i32, %arg0, %c0_i32_0 : i32, i32, i32
  }
  func.func @transform_5(%arg0: i32) -> (i32, i32, i32) {
    %c0_i32 = arith.constant 0 : i32
    %c0_i32_0 = arith.constant 0 : i32
    %c0_i32_1 = arith.constant 0 : i32
    return %c0_i32, %arg0, %c0_i32_0 : i32, i32, i32
  }
  func.func @transform_6(%arg0: i32) -> (i32, i32, i32) {
    %c0_i32 = arith.constant 0 : i32
    %c0_i32_0 = arith.constant 0 : i32
    %c0_i32_1 = arith.constant 0 : i32
    return %c0_i32, %arg0, %c0_i32_0 : i32, i32, i32
  }
  func.func @transform_7(%arg0: i32) -> (i32, i32, i32) {
    %c0_i32 = arith.constant 0 : i32
    %c0_i32_0 = arith.constant 0 : i32
    %c0_i32_1 = arith.constant 0 : i32
    return %c0_i32, %arg0, %c0_i32_0 : i32, i32, i32
  }
  func.func @transform_8(%arg0: i32) -> (i32, i32, i32) {
    %c0_i32 = arith.constant 0 : i32
    %c0_i32_0 = arith.constant 0 : i32
    %c0_i32_1 = arith.constant 0 : i32
    return %c0_i32, %arg0, %c0_i32_0 : i32, i32, i32
  }
  func.func @transform_9(%arg0: i32) -> (i32, i32) {
    %c0_i32 = arith.constant 0 : i32
    %c0_i32_0 = arith.constant 0 : i32
    %c0_i32_1 = arith.constant 0 : i32
    return %c0_i32, %c0_i32_0 : i32, i32
  }
}

</mosaic_0001>

<llo_original>
// kernel: tpu_custom_call.1
$region0: #{tpu_custom_call.1}
  #allocation0 [shape = 'u32[]', space=smem, size = 0x4, offset = 0x4, fixed_abs, tag = 'smem constant byte address 0x4 - core index']
  #allocation1 [shape = 'u32[144,128]{1,0:T(1,128)}', space=vmem, size = 0x12000, scoped, tag = 'internal scratch']
  #allocation2 [shape = 'f32[8,2,128]{2,1,0:T(2,128)}', space=vmem, size = 0x2000, scoped, tag = 'scratch operand']
  %s0 = inlined_call_operand.hbm [shape: f32[2,3,2,128], index: 0, kind: input, shape index: {}]
  %s1 = inlined_call_operand.hbm [shape: f32[2,3,2,128], index: 1, kind: input, shape index: {}]
  %s2 = inlined_call_operand.hbm [shape: f32[2,3,2,128], index: 2, kind: input, shape index: {}]
  %s3 = inlined_call_operand.vmem [shape: f32[2,2,128], index: 3, kind: input, shape index: {}]
  %s4 = inlined_call_operand.hbm [shape: f32[2,2,128], index: 4, kind: input, shape index: {}]
  %s5 = inlined_call_operand.vmem [shape: f32[2,2,128], index: 5, kind: input, shape index: {}]
  %s6 = inlined_call_operand.hbm [shape: f32[2,2,128], index: 6, kind: input, shape index: {}]
  %s7 = inlined_call_operand.vmem [shape: f32[2,2,128], index: 7, kind: input, shape index: {}]
  %s8 = inlined_call_operand.hbm [shape: f32[2,2,128], index: 8, kind: input, shape index: {}]
  %s9 = inlined_call_operand.hbm [shape: f32[1,128], index: 9, kind: output, shape index: {}]
  %s10 = sld [smem:[#allocation0]]
  $region78: #{tpu_custom_call.1} parent=0
    _
  %s12 = ssub.s32 1, %s10
  %s13 = scalar_select 0, %s12, %s10
  $region1: #{tpu_custom_call.1} parent=0
    #allocation3 [shape = 'u8[6144]{0}', space=vmem, size = 0x1800, scoped, tag = 'input window, operand 0, single buffered']
    #allocation4 [shape = 's32[1]{0}', space=sflag, size = 0x4, scoped, tag = 'scoped memory for tpu_custom_call.1']
    #allocation5 [shape = 's32[1]{0}', space=sflag, size = 0x4, scoped, tag = 'scoped memory for tpu_custom_call.1']
    #allocation6 [shape = 'u8[6144]{0}', space=vmem, size = 0x1800, scoped, tag = 'input window, operand 1, single buffered']
    #allocation7 [shape = 's32[1]{0}', space=sflag, size = 0x4, scoped, tag = 'scoped memory for tpu_custom_call.1']
    #allocation8 [shape = 'u8[6144]{0}', space=vmem, size = 0x1800, scoped, tag = 'input window, operand 2, single buffered']
    #allocation9 [shape = 'u8[2048]{0}', space=vmem, size = 0x800, scoped, tag = 'input window, operand 4, single buffered']
    #allocation10 [shape = 's32[1]{0}', space=sflag, size = 0x4, scoped, tag = 'scoped memory for tpu_custom_call.1']
    #allocation11 [shape = 'u8[2048]{0}', space=vmem, size = 0x800, scoped, tag = 'input window, operand 6, single buffered']
    #allocation12 [shape = 'u8[2048]{0}', space=vmem, size = 0x800, scoped, tag = 'input window, operand 8, single buffered']
    #allocation13 [shape = 's32[1]{0}', space=sflag, size = 0x4, scoped, tag = 'scoped memory for tpu_custom_call.1']
    #allocation14 [shape = 'u8[512]{0}', space=vmem, size = 0x400, scoped, tag = 'output window, operand 0, single buffered']
    %14 = vsyncpa [#allocation4], 0
    %15 = vsyncpa [#allocation7], 0
    %16 = vsyncpa [#allocation10], 0
    %17 = vsyncpa [#allocation13], 0
    %18 = vsyncpa [#allocation5], 0
    // Predicated region
    $region2: #{tpu_custom_call.1} parent=1 // pred_check
      _
    $region3: #{tpu_custom_call.1} parent=1 // pred_check_branch
      %20 = sbr.rel (0) target = $region5
    $region4: #{tpu_custom_call.1} parent=1 // pred_region
      %s22 = ssub.s32 192, 192
      %23 = vsyncadd [#allocation4], %s22
      %s24 = sshll.u32 [#allocation3], 4
      %s25 = int_to_ptr.vmem [resolvable:$true] %s24
      %30 = dma.hbm_to_vmem [thread:$0]  %s0, 192, %s25, [#allocation4], 32, 32, 2
    $region5: #{tpu_custom_call.1} parent=1 // pred_fallthru
      _
    // Predicated region
    $region6: #{tpu_custom_call.1} parent=1 // pred_check
      _
    $region7: #{tpu_custom_call.1} parent=1 // pred_check_branch
      %32 = sbr.rel (0) target = $region9
    $region8: #{tpu_custom_call.1} parent=1 // pred_region
      %s34 = ssub.s32 192, 192
      %35 = vsyncadd [#allocation7], %s34
      %s36 = sshll.u32 [#allocation6], 4
      %s37 = int_to_ptr.vmem [resolvable:$true] %s36
      %42 = dma.hbm_to_vmem [thread:$0]  %s1, 192, %s37, [#allocation7], 32, 32, 2
    $region9: #{tpu_custom_call.1} parent=1 // pred_fallthru
      _
    // Predicated region
    $region10: #{tpu_custom_call.1} parent=1 // pred_check
      _
    $region11: #{tpu_custom_call.1} parent=1 // pred_check_branch
      %44 = sbr.rel (0) target = $region13
    $region12: #{tpu_custom_call.1} parent=1 // pred_region
      %s46 = ssub.s32 192, 192
      %47 = vsyncadd [#allocation7], %s46
      %s48 = sshll.u32 [#allocation8], 4
      %s49 = int_to_ptr.vmem [resolvable:$true] %s48
      %54 = dma.hbm_to_vmem [thread:$0]  %s2, 192, %s49, [#allocation7], 32, 32, 2
    $region13: #{tpu_custom_call.1} parent=1 // pred_fallthru
      _
    // Predicated region
    $region14: #{tpu_custom_call.1} parent=1 // pred_check
      _
    $region15: #{tpu_custom_call.1} parent=1 // pred_check_branch
      %56 = sbr.rel (0) target = $region17
    $region16: #{tpu_custom_call.1} parent=1 // pred_region
      _
    $region17: #{tpu_custom_call.1} parent=1 // pred_fallthru
      _
    // Predicated region
    $region18: #{tpu_custom_call.1} parent=1 // pred_check
      _
    $region19: #{tpu_custom_call.1} parent=1 // pred_check_branch
      %58 = sbr.rel (0) target = $region21
    $region20: #{tpu_custom_call.1} parent=1 // pred_region
      %s60 = ssub.s32 64, 64
      %61 = vsyncadd [#allocation10], %s60
      %s62 = sshll.u32 [#allocation9], 4
      %s63 = int_to_ptr.vmem [resolvable:$true] %s62
      %68 = dma.hbm_to_vmem [thread:$0]  %s4, 64, %s63, [#allocation10], 32, 32, 2
    $region21: #{tpu_custom_call.1} parent=1 // pred_fallthru
      _
    // Predicated region
    $region22: #{tpu_custom_call.1} parent=1 // pred_check
      _
    $region23: #{tpu_custom_call.1} parent=1 // pred_check_branch
      %70 = sbr.rel (0) target = $region25
    $region24: #{tpu_custom_call.1} parent=1 // pred_region
      _
    $region25: #{tpu_custom_call.1} parent=1 // pred_fallthru
      _
    // Predicated region
    $region26: #{tpu_custom_call.1} parent=1 // pred_check
      _
    $region27: #{tpu_custom_call.1} parent=1 // pred_check_branch
      %72 = sbr.rel (0) target = $region29
    $region28: #{tpu_custom_call.1} parent=1 // pred_region
      %s74 = ssub.s32 64, 64
      %75 = vsyncadd [#allocation10], %s74
      %s76 = sshll.u32 [#allocation11], 4
      %s77 = int_to_ptr.vmem [resolvable:$true] %s76
      %82 = dma.hbm_to_vmem [thread:$0]  %s6, 64, %s77, [#allocation10], 32, 32, 2
    $region29: #{tpu_custom_call.1} parent=1 // pred_fallthru
      _
    // Predicated region
    $region30: #{tpu_custom_call.1} parent=1 // pred_check
      _
    $region31: #{tpu_custom_call.1} parent=1 // pred_check_branch
      %84 = sbr.rel (0) target = $region33
    $region32: #{tpu_custom_call.1} parent=1 // pred_region
      _
    $region33: #{tpu_custom_call.1} parent=1 // pred_fallthru
      _
    // Predicated region
    $region34: #{tpu_custom_call.1} parent=1 // pred_check
      _
    $region35: #{tpu_custom_call.1} parent=1 // pred_check_branch
      %86 = sbr.rel (0) target = $region37
    $region36: #{tpu_custom_call.1} parent=1 // pred_region
      %s88 = ssub.s32 64, 64
      %89 = vsyncadd [#allocation13], %s88
      %s90 = sshll.u32 [#allocation12], 4
      %s91 = int_to_ptr.vmem [resolvable:$true] %s90
      %96 = dma.hbm_to_vmem [thread:$0]  %s8, 64, %s91, [#allocation13], 32, 32, 2
    $region37: #{tpu_custom_call.1} parent=1 // pred_fallthru
      _
    // Predicated region
    $region38: #{tpu_custom_call.1} parent=1 // pred_check
      _
    $region39: #{tpu_custom_call.1} parent=1 // pred_check_branch
      %98 = sbr.rel (0) target = $region41
    $region40: #{tpu_custom_call.1} parent=1 // pred_region
      %99 = dma.done [#allocation4], 192
    $region41: #{tpu_custom_call.1} parent=1 // pred_fallthru
      _
    // Predicated region
    $region42: #{tpu_custom_call.1} parent=1 // pred_check
      _
    $region43: #{tpu_custom_call.1} parent=1 // pred_check_branch
      %101 = sbr.rel (0) target = $region45
    $region44: #{tpu_custom_call.1} parent=1 // pred_region
      %102 = dma.done [#allocation7], 192
    $region45: #{tpu_custom_call.1} parent=1 // pred_fallthru
      _
    // Predicated region
    $region46: #{tpu_custom_call.1} parent=1 // pred_check
      _
    $region47: #{tpu_custom_call.1} parent=1 // pred_check_branch
      %104 = sbr.rel (0) target = $region49
    $region48: #{tpu_custom_call.1} parent=1 // pred_region
      %105 = dma.done [#allocation7], 192
    $region49: #{tpu_custom_call.1} parent=1 // pred_fallthru
      _
    // Predicated region
    $region50: #{tpu_custom_call.1} parent=1 // pred_check
      _
    $region51: #{tpu_custom_call.1} parent=1 // pred_check_branch
      %107 = sbr.rel (0) target = $region53
    $region52: #{tpu_custom_call.1} parent=1 // pred_region
      %108 = dma.done [#allocation10], 64
    $region53: #{tpu_custom_call.1} parent=1 // pred_fallthru
      _
    // Predicated region
    $region54: #{tpu_custom_call.1} parent=1 // pred_check
      _
    $region55: #{tpu_custom_call.1} parent=1 // pred_check_branch
      %110 = sbr.rel (0) target = $region57
    $region56: #{tpu_custom_call.1} parent=1 // pred_region
      %111 = dma.done [#allocation10], 64
    $region57: #{tpu_custom_call.1} parent=1 // pred_fallthru
      _
    // Predicated region
    $region58: #{tpu_custom_call.1} parent=1 // pred_check
      _
    $region59: #{tpu_custom_call.1} parent=1 // pred_check_branch
      %113 = sbr.rel (0) target = $region61
    $region60: #{tpu_custom_call.1} parent=1 // pred_region
      %114 = dma.done [#allocation13], 64
    $region61: #{tpu_custom_call.1} parent=1 // pred_fallthru
      _
    %p115 = scmp.eq.s32.totalorder 0, 0
    // Predicated region
    $region62: #{tpu_custom_call.1} parent=1 // pred_check
      %p116 = pneg %p115
    $region63: #{tpu_custom_call.1} parent=1 // pred_check_branch
      %118 = sbr.rel (%p116) target = $region65
    $region64: #{tpu_custom_call.1} parent=1 // pred_region
      %119 = vst [vmem:[#allocation2] sm:$0x3] 0.0
      %120 = vst [vmem:[#allocation2 + $0x2] sm:$0x3] 0.0
      %121 = vst [vmem:[#allocation2 + $0x4] sm:$0x3] 0.0
      %122 = vst [vmem:[#allocation2 + $0x6] sm:$0x3] 0.0
      %123 = vst [vmem:[#allocation2 + $0x8] sm:$0x3] 0.0
      %124 = vst [vmem:[#allocation2 + $0xa] sm:$0x3] 0.0
      %125 = vst [vmem:[#allocation2 + $0xc] sm:$0x3] 0.0
      %126 = vst [vmem:[#allocation2 + $0xe] sm:$0x3] 0.0
    $region65: #{tpu_custom_call.1} parent=1 // pred_fallthru
      _
    %v127 = vld [vmem:[%s3] sm:$0x3]
    %v128 = vld [vmem:[%s3 + $0x2] sm:$0x3]
    %v129 = vld [vmem:[#allocation8] sm:$0x3]
    %v130 = vld [vmem:[#allocation8 + $0x2] sm:$0x3]
    %v131 = vld [vmem:[#allocation8 + $0x4] sm:$0x3]
    %v132 = vld [vmem:[#allocation8 + $0x6] sm:$0x3]
    %v133 = vld [vmem:[#allocation8 + $0x8] sm:$0x3]
    %v134 = vld [vmem:[#allocation8 + $0xa] sm:$0x3]
    %v135 = vld [vmem:[#allocation2] sm:$0x3]
    %vm136 = vcmask 1041408
    %v137 = vsel %vm136, %v127, 0.0
    %v138 = vrot.slane %v137, 4
    %v139 = vadd.f32 %v137, %v138
    %v140 = vrot.slane %v139, 2
    %v141 = vadd.f32 %v139, %v140
    %v142 = vrot.slane %v141, 1
    %v143 = vadd.f32 %v141, %v142
    %v144 = vsel %vm136, %v128, 0.0
    %v145 = vrot.slane %v144, 4
    %v146 = vadd.f32 %v144, %v145
    %v147 = vrot.slane %v146, 2
    %v148 = vadd.f32 %v146, %v147
    %v149 = vrot.slane %v148, 1
    %v150 = vadd.f32 %v148, %v149
    %vm153 = vcmask 1041409
    %v154 = vsel %vm153, %v150, %v143
    %v156 = vadd.f32 %v135, %v154
    %157 = vst [vmem:[#allocation2] sm:$0x3] %v156
    %v158 = vld [vmem:[#allocation3] sm:$0x3]
    %v159 = vld [vmem:[#allocation3 + $0x2] sm:$0x3]
    %v160 = vld [vmem:[#allocation3 + $0x4] sm:$0x3]
    %v161 = vld [vmem:[#allocation3 + $0x6] sm:$0x3]
    %v162 = vld [vmem:[#allocation3 + $0x8] sm:$0x3]
    %v163 = vld [vmem:[#allocation3 + $0xa] sm:$0x3]
    %v164 = vsub.f32 %v158, %v129
    %v165 = vsub.f32 %v159, %v130
    %v166 = vsub.f32 %v160, %v131
    %v167 = vsub.f32 %v161, %v132
    %v168 = vsub.f32 %v162, %v133
    %v169 = vsub.f32 %v163, %v134
    %v170 = vand.u32 2147483647, %v164
    %v171 = vand.u32 2147483647, %v165
    %v172 = vand.u32 2147483647, %v166
    %v173 = vand.u32 2147483647, %v167
    %v174 = vand.u32 2147483647, %v168
    %v175 = vand.u32 2147483647, %v169
    %v176 = vsel %vm136, %v170, 0.0
    %v177 = vsel %vm136, %v171, 0.0
    %v178 = vadd.f32 %v176, %v177
    %v179 = vsel %vm136, %v172, 0.0
    %v180 = vadd.f32 %v178, %v179
    %v181 = vsel %vm136, %v173, 0.0
    %v182 = vsel %vm136, %v174, 0.0
    %v183 = vadd.f32 %v181, %v182
    %v184 = vsel %vm136, %v175, 0.0
    %v185 = vadd.f32 %v183, %v184
    %s186 = scalar_lea.vmem [#allocation2], 2
    %v187 = vld [vmem:[%s186] sm:$0x3]
    %v188 = vmul.f32 %v180, %v127
    %v189 = vmul.f32 %v185, %v128
    %v190 = vsel %vm136, %v188, 0.0
    %v191 = vrot.slane %v190, 4
    %v192 = vadd.f32 %v190, %v191
    %v193 = vrot.slane %v192, 2
    %v194 = vadd.f32 %v192, %v193
    %v195 = vrot.slane %v194, 1
    %v196 = vadd.f32 %v194, %v195
    %v197 = vsel %vm136, %v189, 0.0
    %v198 = vrot.slane %v197, 4
    %v199 = vadd.f32 %v197, %v198
    %v200 = vrot.slane %v199, 2
    %v201 = vadd.f32 %v199, %v200
    %v202 = vrot.slane %v201, 1
    %v203 = vadd.f32 %v201, %v202
    %v206 = vsel %vm153, %v203, %v196
    %v208 = vadd.f32 %v187, %v206
    %209 = vst [vmem:[%s186] sm:$0x3] %v208
    %v210 = vld [vmem:[#allocation6] sm:$0x3]
    %v211 = vld [vmem:[#allocation6 + $0x2] sm:$0x3]
    %v212 = vld [vmem:[#allocation6 + $0x4] sm:$0x3]
    %v213 = vld [vmem:[#allocation6 + $0x6] sm:$0x3]
    %v214 = vld [vmem:[#allocation6 + $0x8] sm:$0x3]
    %v215 = vld [vmem:[#allocation6 + $0xa] sm:$0x3]
    %v216 = vsub.f32 %v210, %v129
    %v217 = vsub.f32 %v211, %v130
    %v218 = vsub.f32 %v212, %v131
    %v219 = vsub.f32 %v213, %v132
    %v220 = vsub.f32 %v214, %v133
    %v221 = vsub.f32 %v215, %v134
    %v222 = vand.u32 2147483647, %v216
    %v223 = vand.u32 2147483647, %v217
    %v224 = vand.u32 2147483647, %v218
    %v225 = vand.u32 2147483647, %v219
    %v226 = vand.u32 2147483647, %v220
    %v227 = vand.u32 2147483647, %v221
    %v228 = vsel %vm136, %v222, 0.0
    %v229 = vsel %vm136, %v223, 0.0
    %v230 = vadd.f32 %v228, %v229
    %v231 = vsel %vm136, %v224, 0.0
    %v232 = vadd.f32 %v230, %v231
    %v233 = vsel %vm136, %v225, 0.0
    %v234 = vsel %vm136, %v226, 0.0
    %v235 = vadd.f32 %v233, %v234
    %v236 = vsel %vm136, %v227, 0.0
    %v237 = vadd.f32 %v235, %v236
    %s238 = scalar_lea.vmem [#allocation2], 4
    %v239 = vld [vmem:[%s238] sm:$0x3]
    %v240 = vmul.f32 %v232, %v127
    %v241 = vmul.f32 %v237, %v128
    %v242 = vsel %vm136, %v240, 0.0
    %v243 = vrot.slane %v242, 4
    %v244 = vadd.f32 %v242, %v243
    %v245 = vrot.slane %v244, 2
    %v246 = vadd.f32 %v244, %v245
    %v247 = vrot.slane %v246, 1
    %v248 = vadd.f32 %v246, %v247
    %v249 = vsel %vm136, %v241, 0.0
    %v250 = vrot.slane %v249, 4
    %v251 = vadd.f32 %v249, %v250
    %v252 = vrot.slane %v251, 2
    %v253 = vadd.f32 %v251, %v252
    %v254 = vrot.slane %v253, 1
    %v255 = vadd.f32 %v253, %v254
    %v258 = vsel %vm153, %v255, %v248
    %v260 = vadd.f32 %v239, %v258
    %261 = vst [vmem:[%s238] sm:$0x3] %v260
    %v262 = vmax.f32 %v127, 0.0
    %v263 = vmax.f32 %v128, 0.0
    %v264 = vmin.f32 %v262, 1.0
    %v265 = vmin.f32 %v263, 1.0
    %v266 = vsub.f32 1.0, %v264
    %v267 = vsub.f32 1.0, %v265
    %v268 = vld [vmem:[#allocation9] sm:$0x3]
    %v269 = vld [vmem:[#allocation9 + $0x2] sm:$0x3]
    %v270 = vmax.f32 %v268, 0.0
    %v271 = vmax.f32 %v269, 0.0
    %v272 = vmin.f32 %v270, 1.0
    %v273 = vmin.f32 %v271, 1.0
    %v274 = vlog2.pop %v272
    %v275 = vmul.f32 %v274, 0.6931472
    %v276 = vlog2.pop %v273
    %v277 = vmul.f32 %v276, 0.6931472
    %v278 = vmax.f32 %v275, -100.0
    %v279 = vmax.f32 %v277, -100.0
    %v280 = vsub.f32 1.0, %v272
    %v281 = vsub.f32 1.0, %v273
    %v282 = vlog2.pop %v280
    %v283 = vmul.f32 %v282, 0.6931472
    %v284 = vlog2.pop %v281
    %v285 = vmul.f32 %v284, 0.6931472
    %v286 = vmax.f32 %v283, -100.0
    %v287 = vmax.f32 %v285, -100.0
    %v288 = vmul.f32 %v264, %v278
    %v289 = vmul.f32 %v265, %v279
    %v290 = vmul.f32 %v266, %v286
    %v291 = vmul.f32 %v267, %v287
    %v292 = vadd.f32 %v288, %v290
    %v293 = vadd.f32 %v289, %v291
    %v294 = vsub.f32 0.0, %v292
    %v295 = vsub.f32 0.0, %v293
    %s296 = scalar_lea.vmem [#allocation2], 6
    %v297 = vld [vmem:[%s296] sm:$0x3]
    %v298 = vsel %vm136, %v294, 0.0
    %v299 = vrot.slane %v298, 4
    %v300 = vadd.f32 %v298, %v299
    %v301 = vrot.slane %v300, 2
    %v302 = vadd.f32 %v300, %v301
    %v303 = vrot.slane %v302, 1
    %v304 = vadd.f32 %v302, %v303
    %v305 = vsel %vm136, %v295, 0.0
    %v306 = vrot.slane %v305, 4
    %v307 = vadd.f32 %v305, %v306
    %v308 = vrot.slane %v307, 2
    %v309 = vadd.f32 %v307, %v308
    %v310 = vrot.slane %v309, 1
    %v311 = vadd.f32 %v309, %v310
    %v314 = vsel %vm153, %v311, %v304
    %v316 = vadd.f32 %v297, %v314
    %317 = vst [vmem:[%s296] sm:$0x3] %v316
    %v318 = vld [vmem:[%s5] sm:$0x3]
    %v319 = vld [vmem:[%s5 + $0x2] sm:$0x3]
    %v320 = vmax.f32 %v318, 0.0
    %v321 = vmax.f32 %v319, 0.0
    %v322 = vmin.f32 %v320, 1.0
    %v323 = vmin.f32 %v321, 1.0
    %v324 = vlog2.pop %v322
    %v325 = vmul.f32 %v324, 0.6931472
    %v326 = vlog2.pop %v323
    %v327 = vmul.f32 %v326, 0.6931472
    %v328 = vmax.f32 %v325, -100.0
    %v329 = vmax.f32 %v327, -100.0
    %v330 = vsub.f32 1.0, %v322
    %v331 = vsub.f32 1.0, %v323
    %v332 = vlog2.pop %v330
    %v333 = vmul.f32 %v332, 0.6931472
    %v334 = vlog2.pop %v331
    %v335 = vmul.f32 %v334, 0.6931472
    %v336 = vmax.f32 %v333, -100.0
    %v337 = vmax.f32 %v335, -100.0
    %v338 = vmul.f32 %v264, %v328
    %v339 = vmul.f32 %v265, %v329
    %v340 = vmul.f32 %v266, %v336
    %v341 = vmul.f32 %v267, %v337
    %v342 = vadd.f32 %v338, %v340
    %v343 = vadd.f32 %v339, %v341
    %v344 = vsub.f32 0.0, %v342
    %v345 = vsub.f32 0.0, %v343
    %s346 = scalar_lea.vmem [#allocation2], 8
    %v347 = vld [vmem:[%s346] sm:$0x3]
    %v348 = vsel %vm136, %v344, 0.0
    %v349 = vrot.slane %v348, 4
    %v350 = vadd.f32 %v348, %v349
    %v351 = vrot.slane %v350, 2
    %v352 = vadd.f32 %v350, %v351
    %v353 = vrot.slane %v352, 1
    %v354 = vadd.f32 %v352, %v353
    %v355 = vsel %vm136, %v345, 0.0
    %v356 = vrot.slane %v355, 4
    %v357 = vadd.f32 %v355, %v356
    %v358 = vrot.slane %v357, 2
    %v359 = vadd.f32 %v357, %v358
    %v360 = vrot.slane %v359, 1
    %v361 = vadd.f32 %v359, %v360
    %v364 = vsel %vm153, %v361, %v354
    %v366 = vadd.f32 %v347, %v364
    %367 = vst [vmem:[%s346] sm:$0x3] %v366
    %v368 = vld [vmem:[#allocation11] sm:$0x3]
    %v369 = vld [vmem:[#allocation11 + $0x2] sm:$0x3]
    %v370 = vmax.f32 %v368, 0.0
    %v371 = vmax.f32 %v369, 0.0
    %v372 = vmin.f32 %v370, 1.0
    %v373 = vmin.f32 %v371, 1.0
    %v374 = vlog2.pop %v372
    %v375 = vmul.f32 %v374, 0.6931472
    %v376 = vlog2.pop %v373
    %v377 = vmul.f32 %v376, 0.6931472
    %v378 = vmax.f32 %v375, -100.0
    %v379 = vmax.f32 %v377, -100.0
    %v380 = vsub.f32 1.0, %v372
    %v381 = vsub.f32 1.0, %v373
    %v382 = vlog2.pop %v380
    %v383 = vmul.f32 %v382, 0.6931472
    %v384 = vlog2.pop %v381
    %v385 = vmul.f32 %v384, 0.6931472
    %v386 = vmax.f32 %v383, -100.0
    %v387 = vmax.f32 %v385, -100.0
    %v388 = vmul.f32 %v264, %v378
    %v389 = vmul.f32 %v265, %v379
    %v390 = vmul.f32 %v266, %v386
    %v391 = vmul.f32 %v267, %v387
    %v392 = vadd.f32 %v388, %v390
    %v393 = vadd.f32 %v389, %v391
    %v394 = vsub.f32 0.0, %v392
    %v395 = vsub.f32 0.0, %v393
    %s396 = scalar_lea.vmem [#allocation2], 10
    %v397 = vld [vmem:[%s396] sm:$0x3]
    %v398 = vsel %vm136, %v394, 0.0
    %v399 = vrot.slane %v398, 4
    %v400 = vadd.f32 %v398, %v399
    %v401 = vrot.slane %v400, 2
    %v402 = vadd.f32 %v400, %v401
    %v403 = vrot.slane %v402, 1
    %v404 = vadd.f32 %v402, %v403
    %v405 = vsel %vm136, %v395, 0.0
    %v406 = vrot.slane %v405, 4
    %v407 = vadd.f32 %v405, %v406
    %v408 = vrot.slane %v407, 2
    %v409 = vadd.f32 %v407, %v408
    %v410 = vrot.slane %v409, 1
    %v411 = vadd.f32 %v409, %v410
    %v414 = vsel %vm153, %v411, %v404
    %v416 = vadd.f32 %v397, %v414
    %417 = vst [vmem:[%s396] sm:$0x3] %v416
    %v418 = vld [vmem:[%s7] sm:$0x3]
    %v419 = vld [vmem:[%s7 + $0x2] sm:$0x3]
    %v420 = vmax.f32 %v418, 0.0
    %v421 = vmax.f32 %v419, 0.0
    %v422 = vmin.f32 %v420, 1.0
    %v423 = vmin.f32 %v421, 1.0
    %v424 = vlog2.pop %v422
    %v425 = vmul.f32 %v424, 0.6931472
    %v426 = vlog2.pop %v423
    %v427 = vmul.f32 %v426, 0.6931472
    %v428 = vmax.f32 %v425, -100.0
    %v429 = vmax.f32 %v427, -100.0
    %v430 = vsub.f32 1.0, %v422
    %v431 = vsub.f32 1.0, %v423
    %v432 = vlog2.pop %v430
    %v433 = vmul.f32 %v432, 0.6931472
    %v434 = vlog2.pop %v431
    %v435 = vmul.f32 %v434, 0.6931472
    %v436 = vmax.f32 %v433, -100.0
    %v437 = vmax.f32 %v435, -100.0
    %v438 = vmul.f32 %v264, %v428
    %v439 = vmul.f32 %v265, %v429
    %v440 = vmul.f32 %v266, %v436
    %v441 = vmul.f32 %v267, %v437
    %v442 = vadd.f32 %v438, %v440
    %v443 = vadd.f32 %v439, %v441
    %v444 = vsub.f32 0.0, %v442
    %v445 = vsub.f32 0.0, %v443
    %s446 = scalar_lea.vmem [#allocation2], 12
    %v447 = vld [vmem:[%s446] sm:$0x3]
    %v448 = vsel %vm136, %v444, 0.0
    %v449 = vrot.slane %v448, 4
    %v450 = vadd.f32 %v448, %v449
    %v451 = vrot.slane %v450, 2
    %v452 = vadd.f32 %v450, %v451
    %v453 = vrot.slane %v452, 1
    %v454 = vadd.f32 %v452, %v453
    %v455 = vsel %vm136, %v445, 0.0
    %v456 = vrot.slane %v455, 4
    %v457 = vadd.f32 %v455, %v456
    %v458 = vrot.slane %v457, 2
    %v459 = vadd.f32 %v457, %v458
    %v460 = vrot.slane %v459, 1
    %v461 = vadd.f32 %v459, %v460
    %v464 = vsel %vm153, %v461, %v454
    %v466 = vadd.f32 %v447, %v464
    %467 = vst [vmem:[%s446] sm:$0x3] %v466
    %v468 = vld [vmem:[#allocation12] sm:$0x3]
    %v469 = vld [vmem:[#allocation12 + $0x2] sm:$0x3]
    %v470 = vmax.f32 %v468, 0.0
    %v471 = vmax.f32 %v469, 0.0
    %v472 = vmin.f32 %v470, 1.0
    %v473 = vmin.f32 %v471, 1.0
    %v474 = vlog2.pop %v472
    %v475 = vmul.f32 %v474, 0.6931472
    %v476 = vlog2.pop %v473
    %v477 = vmul.f32 %v476, 0.6931472
    %v478 = vmax.f32 %v475, -100.0
    %v479 = vmax.f32 %v477, -100.0
    %v480 = vsub.f32 1.0, %v472
    %v481 = vsub.f32 1.0, %v473
    %v482 = vlog2.pop %v480
    %v483 = vmul.f32 %v482, 0.6931472
    %v484 = vlog2.pop %v481
    %v485 = vmul.f32 %v484, 0.6931472
    %v486 = vmax.f32 %v483, -100.0
    %v487 = vmax.f32 %v485, -100.0
    %v488 = vmul.f32 %v264, %v478
    %v489 = vmul.f32 %v265, %v479
    %v490 = vmul.f32 %v266, %v486
    %v491 = vmul.f32 %v267, %v487
    %v492 = vadd.f32 %v488, %v490
    %v493 = vadd.f32 %v489, %v491
    %v494 = vsub.f32 0.0, %v492
    %v495 = vsub.f32 0.0, %v493
    %s496 = scalar_lea.vmem [#allocation2], 14
    %v497 = vld [vmem:[%s496] sm:$0x3]
    %v498 = vsel %vm136, %v494, 0.0
    %v499 = vrot.slane %v498, 4
    %v500 = vadd.f32 %v498, %v499
    %v501 = vrot.slane %v500, 2
    %v502 = vadd.f32 %v500, %v501
    %v503 = vrot.slane %v502, 1
    %v504 = vadd.f32 %v502, %v503
    %v505 = vsel %vm136, %v495, 0.0
    %v506 = vrot.slane %v505, 4
    %v507 = vadd.f32 %v505, %v506
    %v508 = vrot.slane %v507, 2
    %v509 = vadd.f32 %v507, %v508
    %v510 = vrot.slane %v509, 1
    %v511 = vadd.f32 %v509, %v510
    %v514 = vsel %vm153, %v511, %v504
    %v516 = vadd.f32 %v497, %v514
    %517 = vst [vmem:[%s496] sm:$0x3] %v516
    // Predicated region
    $region66: #{tpu_custom_call.1} parent=1 // pred_check
      %p518 = pneg %p115
    $region67: #{tpu_custom_call.1} parent=1 // pred_check_branch
      %520 = sbr.rel (%p518) target = $region69
    $region68: #{tpu_custom_call.1} parent=1 // pred_region
      %v521 = vld [vmem:[#allocation2] sm:$0x3]
      %v522 = vsel %vm136, %v521, 0.0
      %523 = vadd.xlane.f32.xlu0 %v522
      %v524 = vpop.xlane.xlu0 %523
      %v525 = vmax.f32 %v524, 1e-06
      %v526 = vrcp.pop %v525
      %v527 = vmul.f32 1.0, %v526
      %v528 = vld [vmem:[%s186] sm:$0x3]
      %v529 = vsel %vm136, %v528, 0.0
      %530 = vadd.xlane.f32.xlu0 %v529
      %v531 = vpop.xlane.xlu0 %530
      %v532 = vmul.f32 %v531, %v527
      %v533 = vsel %vm136, %v532, 0.0
      %v534 = vrot.slane %v533, 4
      %v535 = vadd.f32 %v533, %v534
      %v536 = vrot.slane %v535, 2
      %v537 = vadd.f32 %v535, %v536
      %v538 = vrot.slane %v537, 1
      %v539 = vadd.f32 %v537, %v538
      %v540 = vmul.f32 %v539, 0.5
      %v541 = vsel %vm136, %v531, 0.0
      %v542 = vrot.slane %v541, 4
      %v543 = vadd.f32 %v541, %v542
      %v544 = vrot.slane %v543, 2
      %v545 = vadd.f32 %v543, %v544
      %v546 = vrot.slane %v545, 1
      %v547 = vadd.f32 %v545, %v546
      %v548 = vmul.f32 %v547, 0.0006510417
      %v549 = vadd.f32 %v548, 0.0
      %v550 = vld [vmem:[%s238] sm:$0x3]
      %v551 = vsel %vm136, %v550, 0.0
      %552 = vadd.xlane.f32.xlu0 %v551
      %v553 = vpop.xlane.xlu0 %552
      %v554 = vmul.f32 %v553, %v527
      %v555 = vsel %vm136, %v554, 0.0
      %v556 = vrot.slane %v555, 4
      %v557 = vadd.f32 %v555, %v556
      %v558 = vrot.slane %v557, 2
      %v559 = vadd.f32 %v557, %v558
      %v560 = vrot.slane %v559, 1
      %v561 = vadd.f32 %v559, %v560
      %v562 = vmul.f32 %v561, 0.5
      %v563 = vsel %vm136, %v553, 0.0
      %v564 = vrot.slane %v563, 4
      %v565 = vadd.f32 %v563, %v564
      %v566 = vrot.slane %v565, 2
      %v567 = vadd.f32 %v565, %v566
      %v568 = vrot.slane %v567, 1
      %v569 = vadd.f32 %v567, %v568
      %v570 = vmul.f32 %v569, 0.0006510417
      %v571 = vadd.f32 %v549, %v570
      %v572 = vld [vmem:[%s296] sm:$0x3]
      %v573 = vsel %vm136, %v572, 0.0
      %574 = vadd.xlane.f32.xlu0 %v573
      %v575 = vpop.xlane.xlu0 %574
      %v576 = vsel %vm136, %v575, 0.0
      %v577 = vrot.slane %v576, 4
      %v578 = vadd.f32 %v576, %v577
      %v579 = vrot.slane %v578, 2
      %v580 = vadd.f32 %v578, %v579
      %v581 = vrot.slane %v580, 1
      %v582 = vadd.f32 %v580, %v581
      %v583 = vmul.f32 %v582, 0.001953125
      %v584 = vld [vmem:[%s346] sm:$0x3]
      %v585 = vsel %vm136, %v584, 0.0
      %586 = vadd.xlane.f32.xlu0 %v585
      %v587 = vpop.xlane.xlu0 %586
      %v588 = vsel %vm136, %v587, 0.0
      %v589 = vrot.slane %v588, 4
      %v590 = vadd.f32 %v588, %v589
      %v591 = vrot.slane %v590, 2
      %v592 = vadd.f32 %v590, %v591
      %v593 = vrot.slane %v592, 1
      %v594 = vadd.f32 %v592, %v593
      %v595 = vmul.f32 %v594, 0.001953125
      %v596 = vld [vmem:[%s396] sm:$0x3]
      %v597 = vsel %vm136, %v596, 0.0
      %598 = vadd.xlane.f32.xlu0 %v597
      %v599 = vpop.xlane.xlu0 %598
      %v600 = vsel %vm136, %v599, 0.0
      %v601 = vrot.slane %v600, 4
      %v602 = vadd.f32 %v600, %v601
      %v603 = vrot.slane %v602, 2
      %v604 = vadd.f32 %v602, %v603
      %v605 = vrot.slane %v604, 1
      %v606 = vadd.f32 %v604, %v605
      %v607 = vmul.f32 %v606, 0.001953125
      %v608 = vld [vmem:[%s446] sm:$0x3]
      %v609 = vsel %vm136, %v608, 0.0
      %610 = vadd.xlane.f32.xlu0 %v609
      %v611 = vpop.xlane.xlu0 %610
      %v612 = vsel %vm136, %v611, 0.0
      %v613 = vrot.slane %v612, 4
      %v614 = vadd.f32 %v612, %v613
      %v615 = vrot.slane %v614, 2
      %v616 = vadd.f32 %v614, %v615
      %v617 = vrot.slane %v616, 1
      %v618 = vadd.f32 %v616, %v617
      %v619 = vmul.f32 %v618, 0.001953125
      %v620 = vld [vmem:[%s496] sm:$0x3]
      %v621 = vsel %vm136, %v620, 0.0
      %622 = vadd.xlane.f32.xlu0 %v621
      %v623 = vpop.xlane.xlu0 %622
      %v624 = vsel %vm136, %v623, 0.0
      %v625 = vrot.slane %v624, 4
      %v626 = vadd.f32 %v624, %v625
      %v627 = vrot.slane %v626, 2
      %v628 = vadd.f32 %v626, %v627
      %v629 = vrot.slane %v628, 1
      %v630 = vadd.f32 %v628, %v629
      %v631 = vmul.f32 %v630, 0.001953125
      %v632 = vmul.f32 %v571, 1.5
      %v633 = vadd.f32 %v562, %v632
      %v634 = vadd.f32 %v619, 0.0
      %v635 = vmul.f32 %v595, 0.5
      %v636 = vadd.f32 %v634, %v635
      %v637 = vadd.f32 %v631, 0.0
      %v638 = vmul.f32 %v607, 0.5
      %v639 = vadd.f32 %v637, %v638
      %v640 = vadd.f32 %v583, %v639
      %v641 = vmul.f32 %v636, 0.01
      %v642 = vadd.f32 %v640, %v641
      %v643 = vlaneseq
      %v644 = vand.u32 %v643, 127
      %vm645 = vcmp.eq.s32.totalorder %v644, 0
      %v646 = vsel %vm645, %v633, 0.0
      %vm647 = vcmp.eq.s32.totalorder %v644, 1
      %v648 = vsel %vm647, %v540, %v646
      %vm649 = vcmp.eq.s32.totalorder %v644, 3
      %v650 = vsel %vm649, %v642, %v648
      %651 = vst [vmem:[#allocation14] sm:$0x1] %v650
    $region69: #{tpu_custom_call.1} parent=1 // pred_fallthru
      _
    // Predicated region
    $region70: #{tpu_custom_call.1} parent=1 // pred_check
      _
    $region71: #{tpu_custom_call.1} parent=1 // pred_check_branch
      %653 = sbr.rel (0) target = $region73
    $region72: #{tpu_custom_call.1} parent=1 // pred_region
      %s655 = ssub.s32 16, 16
      %656 = vsyncadd [#allocation5], %s655
      %s658 = sshll.u32 [#allocation14], 4
      %s659 = int_to_ptr.vmem [resolvable:$true] %s658
      %661 = dma.vmem_to_hbm [thread:$0]  %s659, 16, %s9, [#allocation5]
    $region73: #{tpu_custom_call.1} parent=1 // pred_fallthru
      _
    // Predicated region
    $region74: #{tpu_custom_call.1} parent=1 // pred_check
      _
    $region75: #{tpu_custom_call.1} parent=1 // pred_check_branch
      %663 = sbr.rel (0) target = $region77
    $region76: #{tpu_custom_call.1} parent=1 // pred_region
      %664 = dma.done [#allocation5], 16
    $region77: #{tpu_custom_call.1} parent=1 // pred_fallthru
      _
    %665 = vsyncpa [#allocation4], 1
    %666 = vsyncpa [#allocation7], 1
    %667 = vsyncpa [#allocation10], 1
    %668 = vsyncpa [#allocation13], 1
    %669 = vsyncpa [#allocation5], 1

</llo_original>
